<compile_context>
chip_gen: v5e
topology: v5e:2x2
jax: 0.10.0
libtpu: 0.0.40
codegen_flags: <defaults>
</compile_context>

<pallas_src>
import math

import jax
import jax.numpy as jnp
from jax.experimental import pallas as pl
from jax.experimental.pallas import tpu as pltpu


_LANE = 128              # vreg lane width
_MAX_COLS = 16384        # lane-dense slab width cap (multiple of 128)
_MiB = 1024 * 1024


def _copy_kernel(x_ref, o_ref):
    # Identity pass-through of the current VMEM tile.
    o_ref[...] = x_ref[...]


def _sublane_multiple(dtype) -> int:
    # Packed-dtype sublane minimum: f32 -> 8, bf16/f16 -> 16, int8/fp8 -> 32.
    # TODO(synk): float64 is not a supported TPU vector dtype; callers should
    # cast before invoking the kernel.
    itemsize = jnp.dtype(dtype).itemsize
    return max(8, 8 * (4 // max(1, itemsize)))


def _chip_tuning():
    """Per-generation (block_bytes, vmem_limit_bytes) for the copy pipeline."""
    try:
        kind = jax.devices()[0].device_kind.lower()
    except Exception:  # pragma: no cover - defensive; assume a generic TPU
        kind = ""
    if "v5 lite" in kind or "v5lite" in kind or "v5e" in kind:
        # ~0.8 TB/s HBM: 2 MiB blocks already amortize the ~0.35 us step cost.
        return 2 * _MiB, 32 * _MiB
    if "v6" in kind:
        # 128 MiB physical VMEM, ~1.4 TB/s HBM: bigger blocks are cheap.
        return 6 * _MiB, 64 * _MiB
    if "v7" in kind:
        # 3.2 TB/s HBM but only 64 MiB VMEM: 8 MiB blocks, 4x double-buffered
        # = 32 MiB of buffers, still under the 48 MiB scoped limit.
        return 8 * _MiB, 48 * _MiB
    return 4 * _MiB, 48 * _MiB


def _plan(total: int, itemsize: int, sub: int, block_bytes: int):
    """Pick a lane-dense 2D view, block shape, grid and index_map — no padding."""
    if total % _LANE == 0:
        # Widest multiple of 128 that divides `total` (lane-dense full vst rows).
        max_c = min(_MAX_COLS, total)
        cols = _LANE
        for cand in range(max_c - max_c % _LANE, 0, -_LANE):
            if total % cand == 0:
                cols = cand
                break
        rows = total // cols

        if rows <= sub:
            # Tiny input: single block, sublane dim is the full extent.
            tile_r = rows
        else:
            target_rows = max(sub, (block_bytes // (cols * itemsize)) // sub * sub)
            if rows >= 2 * sub:
                # Guarantee >= 2 grid steps so both TensorCores get work (v7x).
                half = max(sub, (rows // 2) // sub * sub)
                target_rows = min(target_rows, half)
            tile_r = min(target_rows, (rows // sub) * sub)

        grid = (pl.cdiv(rows, tile_r),)              # tail block (if any) is masked
        return (rows, cols), (tile_r, cols), grid, (lambda i: (i, 0))

    # Ragged element count: keep an unpadded (1, total) view and tile along the
    # lane axis; the partial tail block is masked in-kernel by Pallas (no
    # wrapper-side pad / slice HBM round trips).  A (1, N) VMEM tile pads to 8
    # sublanes, so keep the data block modest (~block_bytes/8 of real data).
    tile_c = max(_LANE, (block_bytes // (8 * itemsize)) // _LANE * _LANE)
    if tile_c >= total:
        tile_c = total                               # single full-extent block
    grid = (pl.cdiv(total, tile_c),)
    return (1, total), (1, tile_c), grid, (lambda i: (0, i))


def _model_forward_impl(x: jax.Array) -> jax.Array:
    """Pallas implementation of Model.forward (identity pass-through)."""
    orig_shape = x.shape
    dtype = x.dtype
    total = math.prod(orig_shape)

    if total == 0:
        return x  # nothing to copy

    itemsize = jnp.dtype(dtype).itemsize
    sub = _sublane_multiple(dtype)
    block_bytes, vmem_limit = _chip_tuning()
    view, block, grid, index_map = _plan(total, itemsize, sub, block_bytes)

    x2d = x.reshape(view)  # pure relayout of the same buffer — no pad, no copy

    out2d = pl.pallas_call(
        _copy_kernel,
        out_shape=jax.ShapeDtypeStruct(view, dtype),
        grid_spec=pltpu.PrefetchScalarGridSpec(
            num_scalar_prefetch=0,
            grid=grid,
            in_specs=[pl.BlockSpec(block, index_map)],
            out_specs=pl.BlockSpec(block, index_map),
        ),
        compiler_params=pltpu.CompilerParams(
            dimension_semantics=("parallel",),   # shard grid steps across TCs (v7x)
            vmem_limit_bytes=vmem_limit,
        ),
    )(x2d)

    return out2d.reshape(orig_shape)


model_forward = jax.jit(_model_forward_impl)


def match_predict(y_pred: jax.Array, y_true: jax.Array) -> jax.Array:
    # TODO(synk): match_predict is abstract in the source module; a reasonable
    # default (argmax equality) is provided but is not part of the original spec.
    return jnp.argmax(y_pred, axis=-1) == jnp.argmax(y_true, axis=-1)


if __name__ == "__main__":
    key = jax.random.PRNGKey(0)
    # Small NCHW input consistent with a typical image-model interface.
    x = jax.random.normal(key, (2, 4, 16, 16), dtype=jnp.float32)

    y = model_forward(x)
    jax.block_until_ready(y)

    assert y.shape == x.shape
    assert y.dtype == x.dtype
    assert bool(jnp.array_equal(y, x))

    print("KERNEL_OK")
</pallas_src>

<mosaic_0001>
module attributes {stable_mosaic.version = 11 : i64} {
  func.func @_copy_kernel(%arg0: i32, %arg1: memref<1x2048xf32, #tpu.memory_space<vmem>>, %arg2: memref<1x2048xf32, #tpu.memory_space<vmem>>) attributes {dimension_semantics = [#tpu.dimension_semantics<parallel>], iteration_bounds = array<i64: 1>, scalar_prefetch = 0 : i64, scratch_operands = 0 : i64, tpu.core_type = #tpu.core_type<tc>, window_params = [{transform_indices = @transform_0, window_bounds = array<i64: 1, 2048>}, {transform_indices = @transform_1, window_bounds = array<i64: 1, 2048>}]} {
    %c0 = arith.constant 0 : index
    %c0_0 = arith.constant 0 : index
    %0 = vector.load %arg1[%c0, %c0_0] : memref<1x2048xf32, #tpu.memory_space<vmem>>, vector<1x2048xf32>
    %c0_1 = arith.constant 0 : index
    %c0_2 = arith.constant 0 : index
    %1 = vector.load %arg2[%c0_1, %c0_2] : memref<1x2048xf32, #tpu.memory_space<vmem>>, vector<1x2048xf32>
    tpu.vector_store %arg2[%c0_1, %c0_2], %0 {strides = array<i32>} : memref<1x2048xf32, #tpu.memory_space<vmem>>, vector<1x2048xf32>,
    return
  }
  func.func @transform_0(%arg0: i32) -> (i32, i32) {
    %c0_i32 = arith.constant 0 : i32
    %c0_i32_0 = arith.constant 0 : i32
    return %arg0, %c0_i32 : i32, i32
  }
  func.func @transform_1(%arg0: i32) -> (i32, i32) {
    %c0_i32 = arith.constant 0 : i32
    %c0_i32_0 = arith.constant 0 : i32
    return %arg0, %c0_i32 : i32, i32
  }
}

</mosaic_0001>

<llo_original>
// kernel: _model_forward_impl.1
$region0: #{_model_forward_impl.1}
  #allocation0 [shape = 'u32[]', space=smem, size = 0x4, offset = 0x4, fixed_abs, tag = 'smem constant byte address 0x4 - core index']
  #allocation1 [shape = 'u32[72,128]{1,0:T(1,128)}', space=vmem, size = 0x9000, scoped, tag = 'internal scratch']
  %s0 = inlined_call_operand.vmem [shape: f32[1,2048], index: 0, kind: input, shape index: {}]
  %s1 = inlined_call_operand.vmem [shape: f32[1,2048], index: 1, kind: output, shape index: {}]
  %s2 = sld [smem:[#allocation0]]
  $region14: #{_model_forward_impl.1} parent=0
    _
  %s4 = ssub.s32 1, %s2
  %s5 = scalar_select 0, %s4, %s2
  // Predicated region
  $region2: #{_model_forward_impl.1} parent=0 // pred_check
    _
  $region3: #{_model_forward_impl.1} parent=0 // pred_check_branch
    %7 = sbr.rel (0) target = $region5
  $region4: #{_model_forward_impl.1} parent=0 // pred_region
    _
  $region5: #{_model_forward_impl.1} parent=0 // pred_fallthru
    _
  %v8 = vld [vmem:[%s0] sm:$0xff]
  %v9 = vld [vmem:[%s0 + $0x8] sm:$0xff]
  %10 = vst [vmem:[%s1] sm:$0xff] %v8
  %11 = vst [vmem:[%s1 + $0x8] sm:$0xff] %v9
  // Predicated region
  $region6: #{_model_forward_impl.1} parent=0 // pred_check
    _
  $region7: #{_model_forward_impl.1} parent=0 // pred_check_branch
    %13 = sbr.rel (0) target = $region9
  $region8: #{_model_forward_impl.1} parent=0 // pred_region
    _
  $region9: #{_model_forward_impl.1} parent=0 // pred_fallthru
    _
  // Predicated region
  $region10: #{_model_forward_impl.1} parent=0 // pred_check
    _
  $region11: #{_model_forward_impl.1} parent=0 // pred_check_branch
    %15 = sbr.rel (0) target = $region13
  $region12: #{_model_forward_impl.1} parent=0 // pred_region
    _
  $region13: #{_model_forward_impl.1} parent=0 // pred_fallthru
    _

</llo_original>
